<compile_context>
chip_gen: v6e
topology: v6e:2x2x1
jax: 0.10.0
libtpu: 0.0.40
codegen_flags: <defaults>
</compile_context>

<pallas_src>
import functools
import math

import jax
import jax.numpy as jnp
from jax.experimental import pallas as pl
from jax.experimental.pallas import tpu as pltpu

LANES = 128


def _round_up(x, m):
    return ((x + m - 1) // m) * m


def _cdiv(a, b):
    return -(-a // b)


def _sublane_align(dtype):
    # Native tile sublane count: 8 for 32-bit, 16 for 16-bit, 32 for 8-bit.
    itemsize = jnp.dtype(dtype).itemsize
    return max(8, 8 * (4 // max(1, itemsize)))


def _num_tensorcores():
    # 2-way megacore split only pays on v7x (2 TensorCores per chip, each with
    # its own HBM path).  v5e/v6e are single-TC: a size-2 "parallel" axis there
    # is just a serial loop that halves the tile for small inputs.
    try:
        kind = jax.devices()[0].device_kind.lower()
    except Exception:
        return 1
    return 2 if ("v7" in kind or "7x" in kind) else 1


def _mse_var_kernel(vw_ref, mean_ref, var_ref, label_ref, out_ref, *,
                    block_rows, acc_rows, tiles_per_core, valid_rows):
    c = pl.program_id(0)
    t = pl.program_id(1)

    @pl.when(t == 0)
    def _init():
        out_ref[...] = jnp.zeros_like(out_ref)

    # Per-element contribution; the 0.5 factor is folded into the wrapper's
    # final (0.5 / total) scale:  exp(-w*var) * (mean - label)^2 + w*var
    nv = (-vw_ref[0]) * var_ref[...].astype(jnp.float32)
    diff = mean_ref[...].astype(jnp.float32) - label_ref[...].astype(jnp.float32)
    contrib = jnp.exp(nv) * diff * diff - nv

    row_start = (c * tiles_per_core + t) * block_rows
    is_tail = row_start + block_rows > valid_rows

    # Hot path: full tile, no masking, pure vreg adds into the resident
    # (acc_rows, 128) accumulator (acc_rows/8 independent add chains).
    @pl.when(jnp.logical_not(is_tail))
    def _full_tile():
        out_ref[...] += contrib.reshape(-1, acc_rows, LANES).sum(axis=0)

    # Tail (and v7x overhang) tile: mask rows beyond the valid row count.
    # Garbage rows of a partial boundary block contribute exactly 0.
    @pl.when(is_tail)
    def _tail_tile():
        rows = row_start + jax.lax.broadcasted_iota(
            jnp.int32, (block_rows, LANES), 0)
        masked = jnp.where(rows < valid_rows, contrib, 0.0)
        out_ref[...] += masked.reshape(-1, acc_rows, LANES).sum(axis=0)


def mse_var_loss(mean, var, label, var_weight, *, block_rows=None):
    """Pallas implementation of MSE_VAR.forward. Returns a float32 scalar."""
    assert mean.shape == var.shape == label.shape
    total = mean.size
    assert total > 0

    row_align = max(_sublane_align(x.dtype) for x in (mean, var, label))
    max_itemsize = max(jnp.dtype(x.dtype).itemsize for x in (mean, var, label))

    rows = max(1, _cdiv(total, LANES))
    padded_rows = _round_up(rows, row_align)          # tiny granularity (1-2 KiB)
    padded_total = padded_rows * LANES

    if block_rows is None:
        # ~1 MiB per input per tile: 2048 rows (f32), 4096 rows (bf16).
        block_rows = (1 << 20) // (LANES * max_itemsize)
    block_rows = max(row_align, _round_up(int(block_rows), row_align))
    block_rows = min(block_rows, padded_rows)
    acc_rows = math.gcd(block_rows, 64)               # widened accumulator (<=64 rows)

    num_tiles = _cdiv(padded_rows, block_rows)
    num_cores = _num_tensorcores()
    if num_tiles < 2:
        num_cores = 1
    tiles_per_core = _cdiv(num_tiles, num_cores)

    def _prep(x):
        x = x.reshape(-1)
        pad = padded_total - x.shape[0]
        if pad:  # only non-(row_align*128)-multiple sizes pay a pad copy
            x = jnp.pad(x, (0, pad))
        return x.reshape(padded_rows, LANES)

    mean2, var2, label2 = _prep(mean), _prep(var), _prep(label)
    vw = jnp.asarray(var_weight, dtype=jnp.float32).reshape((1,))

    if num_cores * tiles_per_core == num_tiles:
        def data_block(c, t):
            return (c * tiles_per_core + t, 0)
    else:
        # v7x with an odd tile count: clamp the lone overhang tile; its logical
        # rows are >= valid_rows so the in-kernel mask zeroes its contribution.
        def data_block(c, t):
            return (jnp.minimum(c * tiles_per_core + t, num_tiles - 1), 0)

    in_spec = pl.BlockSpec((block_rows, LANES), data_block)
    out_spec = pl.BlockSpec((acc_rows, LANES), lambda c, t: (c, 0))
    smem_spec = pl.BlockSpec(memory_space=pltpu.MemorySpace.SMEM)

    kernel = functools.partial(
        _mse_var_kernel,
        block_rows=block_rows, acc_rows=acc_rows,
        tiles_per_core=tiles_per_core, valid_rows=padded_rows)

    partials = pl.pallas_call(
        kernel,
        out_shape=jax.ShapeDtypeStruct((num_cores * acc_rows, LANES), jnp.float32),
        grid_spec=pltpu.PrefetchScalarGridSpec(
            num_scalar_prefetch=0,
            grid=(num_cores, tiles_per_core),
            in_specs=[smem_spec, in_spec, in_spec, in_spec],
            out_specs=out_spec,
        ),
        compiler_params=pltpu.CompilerParams(
            dimension_semantics=("parallel", "arbitrary")),
    )(vw, mean2, var2, label2)

    # Single cheap cross-lane reduction + mean scale (0.5 folded in here).
    return jnp.sum(partials) * (0.5 / float(total))


def mse_var_ref(mean, var, label, var_weight):
    v = var_weight * var.astype(jnp.float32)
    diff = mean.astype(jnp.float32) - label.astype(jnp.float32)
    loss = 0.5 * (jnp.exp(-v) * diff * diff + v)
    return jnp.mean(loss)


if __name__ == "__main__":
    var_weight = 0.5  # the module's "parameter"
    key = jax.random.PRNGKey(0)
    k1, k2, k3 = jax.random.split(key, 3)

    # 1) Small NCHW f32 input, lane-aligned total (no padding, single tile).
    B, C, H, W = 2, 4, 16, 16
    mean = jax.random.normal(k1, (B, C, H, W), dtype=jnp.float32)
    var = jax.random.normal(k2, (B, C, H, W), dtype=jnp.float32)
    label = jax.random.normal(k3, (B, C, H, W), dtype=jnp.float32)
    out = jax.block_until_ready(mse_var_loss(mean, var, label, var_weight))
    ref = mse_var_ref(mean, var, label, var_weight)
    assert jnp.allclose(out, ref, atol=1e-5, rtol=1e-5), (out, ref)

    # 2) Ragged bf16 (total not a multiple of 128): tiny zero-pad + 16-row
    #    (native bf16 tile) alignment + in-kernel upcast.
    mb = jax.random.normal(k1, (2, 3, 15, 17), dtype=jnp.bfloat16)
    vb = jax.random.normal(k2, (2, 3, 15, 17), dtype=jnp.bfloat16)
    lb = jax.random.normal(k3, (2, 3, 15, 17), dtype=jnp.bfloat16)
    out_b = jax.block_until_ready(mse_var_loss(mb, vb, lb, var_weight))
    ref_b = mse_var_ref(mb, vb, lb, var_weight)
    assert jnp.allclose(out_b, ref_b, atol=1e-4, rtol=1e-4), (out_b, ref_b)

    # 3) Multi-tile grid with a masked partial tail tile, and var_weight as a
    #    traced runtime scalar under jit (no recompile / no float() failure).
    mm = jax.random.normal(k1, (2, 4, 37, 53), dtype=jnp.float32)
    vm = jax.random.normal(k2, (2, 4, 37, 53), dtype=jnp.float32)
    lm = jax.random.normal(k3, (2, 4, 37, 53), dtype=jnp.float32)
    jit_loss = jax.jit(functools.partial(mse_var_loss, block_rows=48))
    out_m = jax.block_until_ready(jit_loss(mm, vm, lm, jnp.float32(0.25)))
    ref_m = mse_var_ref(mm, vm, lm, 0.25)
    assert jnp.allclose(out_m, ref_m, atol=1e-5, rtol=1e-5), (out_m, ref_m)

    print("KERNEL_OK")
</pallas_src>

<mosaic_0001>
module attributes {stable_mosaic.version = 11 : i64} {
  func.func @_mse_var_kernel(%arg0: i32, %arg1: i32, %arg2: memref<1xf32, #tpu.memory_space<smem>>, %arg3: memref<16x128xf32, #tpu.memory_space<vmem>>, %arg4: memref<16x128xf32, #tpu.memory_space<vmem>>, %arg5: memref<16x128xf32, #tpu.memory_space<vmem>>, %arg6: memref<16x128xf32, #tpu.memory_space<vmem>>) attributes {dimension_semantics = [#tpu.dimension_semantics<parallel>, #tpu.dimension_semantics<arbitrary>], iteration_bounds = array<i64: 1, 1>, scalar_prefetch = 0 : i64, scratch_operands = 0 : i64, tpu.core_type = #tpu.core_type<tc>, window_params = [{transform_indices = @transform_0, window_bounds = array<i64: 1>}, {transform_indices = @transform_1, window_bounds = array<i64: 16, 128>}, {transform_indices = @transform_2, window_bounds = array<i64: 16, 128>}, {transform_indices = @transform_3, window_bounds = array<i64: 16, 128>}, {transform_indices = @transform_4, window_bounds = array<i64: 16, 128>}]} {
    %c0_i32 = arith.constant 0 : i32
    %0 = arith.cmpi eq, %arg1, %c0_i32 : i32
    %1 = arith.extui %0 : i1 to i32
    %c0_i32_0 = arith.constant 0 : i32
    %2 = arith.cmpi ne, %1, %c0_i32_0 : i32
    scf.if %2 {
      %cst_11 = arith.constant 0.000000e+00 : f32
      %25 = vector.broadcast %cst_11 : f32 to vector<16x128xf32>
      %c0_12 = arith.constant 0 : index
      %c0_13 = arith.constant 0 : index
      %26 = vector.load %arg6[%c0_12, %c0_13] : memref<16x128xf32, #tpu.memory_space<vmem>>, vector<16x128xf32>
      tpu.vector_store %arg6[%c0_12, %c0_13], %25 {strides = array<i32>} : memref<16x128xf32, #tpu.memory_space<vmem>>, vector<16x128xf32>,
    } else {
    }
    %c0 = arith.constant 0 : index
    %3 = memref.load %arg2[%c0] : memref<1xf32, #tpu.memory_space<smem>>
    %cst = arith.constant 0.000000e+00 : f32
    %4 = arith.subf %cst, %3 : f32
    %c0_1 = arith.constant 0 : index
    %c0_2 = arith.constant 0 : index
    %5 = vector.load %arg4[%c0_1, %c0_2] : memref<16x128xf32, #tpu.memory_space<vmem>>, vector<16x128xf32>
    %6 = vector.broadcast %4 : f32 to vector<16x128xf32>
    %7 = arith.mulf %6, %5 : vector<16x128xf32>
    %c0_3 = arith.constant 0 : index
    %c0_4 = arith.constant 0 : index
    %8 = vector.load %arg3[%c0_3, %c0_4] : memref<16x128xf32, #tpu.memory_space<vmem>>, vector<16x128xf32>
    %c0_5 = arith.constant 0 : index
    %c0_6 = arith.constant 0 : index
    %9 = vector.load %arg5[%c0_5, %c0_6] : memref<16x128xf32, #tpu.memory_space<vmem>>, vector<16x128xf32>
    %10 = arith.subf %8, %9 : vector<16x128xf32>
    %11 = math.exp %7 : vector<16x128xf32>
    %12 = arith.mulf %11, %10 : vector<16x128xf32>
    %13 = arith.mulf %12, %10 : vector<16x128xf32>
    %14 = arith.subf %13, %7 : vector<16x128xf32>
    %c1_i32 = arith.constant 1 : i32
    %15 = arith.muli %arg0, %c1_i32 : i32
    %16 = arith.addi %15, %arg1 : i32
    %c16_i32 = arith.constant 16 : i32
    %17 = arith.muli %16, %c16_i32 : i32
    %c16_i32_7 = arith.constant 16 : i32
    %18 = arith.addi %17, %c16_i32_7 : i32
    %c16_i32_8 = arith.constant 16 : i32
    %19 = arith.cmpi sgt, %18, %c16_i32_8 : i32
    %true = arith.constant true
    %20 = arith.xori %19, %true : i1
    %21 = arith.extui %20 : i1 to i32
    %c0_i32_9 = arith.constant 0 : i32
    %22 = arith.cmpi ne, %21, %c0_i32_9 : i32
    scf.if %22 {
      %c0_11 = arith.constant 0 : index
      %c0_12 = arith.constant 0 : index
      %25 = vector.load %arg6[%c0_11, %c0_12] : memref<16x128xf32, #tpu.memory_space<vmem>>, vector<16x128xf32>
      %26 = vector.shape_cast %14 : vector<16x128xf32> to vector<1x16x128xf32>
      %cst_13 = arith.constant dense<0.000000e+00> : vector<16x128xf32>
      %27 = vector.multi_reduction <add>, %26, %cst_13 [0] : vector<1x16x128xf32> to vector<16x128xf32>
      %28 = arith.addf %25, %27 : vector<16x128xf32>
      %c0_14 = arith.constant 0 : index
      %c0_15 = arith.constant 0 : index
      %29 = vector.load %arg6[%c0_14, %c0_15] : memref<16x128xf32, #tpu.memory_space<vmem>>, vector<16x128xf32>
      tpu.vector_store %arg6[%c0_14, %c0_15], %28 {strides = array<i32>} : memref<16x128xf32, #tpu.memory_space<vmem>>, vector<16x128xf32>,
    } else {
    }
    %23 = arith.extui %19 : i1 to i32
    %c0_i32_10 = arith.constant 0 : i32
    %24 = arith.cmpi ne, %23, %c0_i32_10 : i32
    scf.if %24 {
      %25 = tpu.iota {dimensions = array<i32: 0>} : vector<16x128xi32>
      %26 = vector.broadcast %17 : i32 to vector<16x128xi32>
      %27 = arith.addi %26, %25 : vector<16x128xi32>
      %c16_i32_11 = arith.constant 16 : i32
      %28 = vector.broadcast %c16_i32_11 : i32 to vector<16x128xi32>
      %29 = arith.cmpi slt, %27, %28 : vector<16x128xi32>
      %cst_12 = arith.constant 0.000000e+00 : f32
      %30 = vector.broadcast %cst_12 : f32 to vector<16x128xf32>
      %31 = arith.select %29, %14, %30 : vector<16x128xi1>, vector<16x128xf32>
      %c0_13 = arith.constant 0 : index
      %c0_14 = arith.constant 0 : index
      %32 = vector.load %arg6[%c0_13, %c0_14] : memref<16x128xf32, #tpu.memory_space<vmem>>, vector<16x128xf32>
      %33 = vector.shape_cast %31 : vector<16x128xf32> to vector<1x16x128xf32>
      %cst_15 = arith.constant dense<0.000000e+00> : vector<16x128xf32>
      %34 = vector.multi_reduction <add>, %33, %cst_15 [0] : vector<1x16x128xf32> to vector<16x128xf32>
      %35 = arith.addf %32, %34 : vector<16x128xf32>
      %c0_16 = arith.constant 0 : index
      %c0_17 = arith.constant 0 : index
      %36 = vector.load %arg6[%c0_16, %c0_17] : memref<16x128xf32, #tpu.memory_space<vmem>>, vector<16x128xf32>
      tpu.vector_store %arg6[%c0_16, %c0_17], %35 {strides = array<i32>} : memref<16x128xf32, #tpu.memory_space<vmem>>, vector<16x128xf32>,
    } else {
    }
    return
  }
  func.func @transform_0(%arg0: i32, %arg1: i32) -> i32 {
    %c0_i32 = arith.constant 0 : i32
    %c0_i32_0 = arith.constant 0 : i32
    return %c0_i32 : i32
  }
  func.func @transform_1(%arg0: i32, %arg1: i32) -> (i32, i32) {
    %c1_i32 = arith.constant 1 : i32
    %0 = arith.muli %arg0, %c1_i32 : i32
    %1 = arith.addi %0, %arg1 : i32
    %c0_i32 = arith.constant 0 : i32
    %c0_i32_0 = arith.constant 0 : i32
    return %1, %c0_i32 : i32, i32
  }
  func.func @transform_2(%arg0: i32, %arg1: i32) -> (i32, i32) {
    %c1_i32 = arith.constant 1 : i32
    %0 = arith.muli %arg0, %c1_i32 : i32
    %1 = arith.addi %0, %arg1 : i32
    %c0_i32 = arith.constant 0 : i32
    %c0_i32_0 = arith.constant 0 : i32
    return %1, %c0_i32 : i32, i32
  }
  func.func @transform_3(%arg0: i32, %arg1: i32) -> (i32, i32) {
    %c1_i32 = arith.constant 1 : i32
    %0 = arith.muli %arg0, %c1_i32 : i32
    %1 = arith.addi %0, %arg1 : i32
    %c0_i32 = arith.constant 0 : i32
    %c0_i32_0 = arith.constant 0 : i32
    return %1, %c0_i32 : i32, i32
  }
  func.func @transform_4(%arg0: i32, %arg1: i32) -> (i32, i32) {
    %c0_i32 = arith.constant 0 : i32
    %c0_i32_0 = arith.constant 0 : i32
    return %arg0, %c0_i32 : i32, i32
  }
}

</mosaic_0001>

<llo_original>
// kernel: tpu_custom_call.1
$region0: #{tpu_custom_call.1}
  #allocation0 [shape = 'u32[]', space=smem, size = 0x4, offset = 0x4, fixed_abs, tag = 'smem constant byte address 0x4 - core index']
  #allocation1 [shape = 'u32[144,128]{1,0:T(1,128)}', space=vmem, size = 0x12000, scoped, tag = 'internal scratch']
  #allocation2 [shape = 'f32[1]{0:T(128)S(6)}', space=smem, size = 0x200, scoped, tag = 'scoped memory for tpu_custom_call.1']
  %s0 = inlined_call_operand.<no memory space> [shape: f32[1], index: 0, kind: input, shape index: {}]
  %s1 = inlined_call_operand.hbm [shape: f32[16,128], index: 1, kind: input, shape index: {}]
  %s2 = inlined_call_operand.hbm [shape: f32[16,128], index: 2, kind: input, shape index: {}]
  %s3 = inlined_call_operand.hbm [shape: f32[16,128], index: 3, kind: input, shape index: {}]
  %s4 = inlined_call_operand.hbm [shape: f32[16,128], index: 4, kind: output, shape index: {}]
  %s5 = sld [smem:[#allocation0]]
  $region50: #{tpu_custom_call.1} parent=0
    _
  %s7 = ssub.s32 1, %s5
  %s8 = scalar_select 0, %s7, %s5
  %9 = sst [smem:[#allocation2]] %s0
  $region1: #{tpu_custom_call.1} parent=0
    #allocation3 [shape = 'u8[8192]{0}', space=vmem, size = 0x2000, scoped, tag = 'input window, operand 1, single buffered']
    #allocation4 [shape = 's32[1]{0}', space=sflag, size = 0x4, scoped, tag = 'scoped memory for tpu_custom_call.1']
    #allocation5 [shape = 's32[1]{0}', space=sflag, size = 0x4, scoped, tag = 'scoped memory for tpu_custom_call.1']
    #allocation6 [shape = 'u8[8192]{0}', space=vmem, size = 0x2000, scoped, tag = 'input window, operand 2, single buffered']
    #allocation7 [shape = 's32[1]{0}', space=sflag, size = 0x4, scoped, tag = 'scoped memory for tpu_custom_call.1']
    #allocation8 [shape = 'u8[8192]{0}', space=vmem, size = 0x2000, scoped, tag = 'input window, operand 3, single buffered']
    #allocation9 [shape = 'u8[8192]{0}', space=vmem, size = 0x2000, scoped, tag = 'output window, operand 0, single buffered']
    %10 = vsyncpa [#allocation4], 0
    %11 = vsyncpa [#allocation7], 0
    %12 = vsyncpa [#allocation5], 0
    // Predicated region
    $region2: #{tpu_custom_call.1} parent=1 // pred_check
      _
    $region3: #{tpu_custom_call.1} parent=1 // pred_check_branch
      %14 = sbr.rel (0) target = $region5
    $region4: #{tpu_custom_call.1} parent=1 // pred_region
      _
    $region5: #{tpu_custom_call.1} parent=1 // pred_fallthru
      _
    // Predicated region
    $region6: #{tpu_custom_call.1} parent=1 // pred_check
      _
    $region7: #{tpu_custom_call.1} parent=1 // pred_check_branch
      %16 = sbr.rel (0) target = $region9
    $region8: #{tpu_custom_call.1} parent=1 // pred_region
      %s17 = sadd.s32 0, 0
      %s18 = smul.u32 2, %s17
      %s20 = ssub.s32 256, 256
      %21 = vsyncadd [#allocation4], %s20
      %s22 = smul.addr %s18, 128
      %s23 = scalar_lea.hbm %s1, %s22
      %s24 = sshll.u32 [#allocation3], 4
      %s25 = int_to_ptr.vmem [resolvable:$true] %s24
      %30 = dma.hbm_to_vmem [thread:$0]  %s23, 256, %s25, [#allocation4], 128, 128, 8
    $region9: #{tpu_custom_call.1} parent=1 // pred_fallthru
      _
    // Predicated region
    $region10: #{tpu_custom_call.1} parent=1 // pred_check
      _
    $region11: #{tpu_custom_call.1} parent=1 // pred_check_branch
      %32 = sbr.rel (0) target = $region13
    $region12: #{tpu_custom_call.1} parent=1 // pred_region
      %s33 = sadd.s32 0, 0
      %s34 = smul.u32 2, %s33
      %s36 = ssub.s32 256, 256
      %37 = vsyncadd [#allocation7], %s36
      %s38 = smul.addr %s34, 128
      %s39 = scalar_lea.hbm %s2, %s38
      %s40 = sshll.u32 [#allocation6], 4
      %s41 = int_to_ptr.vmem [resolvable:$true] %s40
      %46 = dma.hbm_to_vmem [thread:$0]  %s39, 256, %s41, [#allocation7], 128, 128, 8
    $region13: #{tpu_custom_call.1} parent=1 // pred_fallthru
      _
    // Predicated region
    $region14: #{tpu_custom_call.1} parent=1 // pred_check
      _
    $region15: #{tpu_custom_call.1} parent=1 // pred_check_branch
      %48 = sbr.rel (0) target = $region17
    $region16: #{tpu_custom_call.1} parent=1 // pred_region
      %s49 = sadd.s32 0, 0
      %s50 = smul.u32 2, %s49
      %s52 = ssub.s32 256, 256
      %53 = vsyncadd [#allocation7], %s52
      %s54 = smul.addr %s50, 128
      %s55 = scalar_lea.hbm %s3, %s54
      %s56 = sshll.u32 [#allocation8], 4
      %s57 = int_to_ptr.vmem [resolvable:$true] %s56
      %62 = dma.hbm_to_vmem [thread:$0]  %s55, 256, %s57, [#allocation7], 128, 128, 8
    $region17: #{tpu_custom_call.1} parent=1 // pred_fallthru
      _
    // Predicated region
    $region18: #{tpu_custom_call.1} parent=1 // pred_check
      _
    $region19: #{tpu_custom_call.1} parent=1 // pred_check_branch
      %64 = sbr.rel (0) target = $region21
    $region20: #{tpu_custom_call.1} parent=1 // pred_region
      %65 = dma.done [#allocation4], 256
    $region21: #{tpu_custom_call.1} parent=1 // pred_fallthru
      _
    // Predicated region
    $region22: #{tpu_custom_call.1} parent=1 // pred_check
      _
    $region23: #{tpu_custom_call.1} parent=1 // pred_check_branch
      %67 = sbr.rel (0) target = $region25
    $region24: #{tpu_custom_call.1} parent=1 // pred_region
      %68 = dma.done [#allocation7], 256
    $region25: #{tpu_custom_call.1} parent=1 // pred_fallthru
      _
    // Predicated region
    $region26: #{tpu_custom_call.1} parent=1 // pred_check
      _
    $region27: #{tpu_custom_call.1} parent=1 // pred_check_branch
      %70 = sbr.rel (0) target = $region29
    $region28: #{tpu_custom_call.1} parent=1 // pred_region
      %71 = dma.done [#allocation7], 256
    $region29: #{tpu_custom_call.1} parent=1 // pred_fallthru
      _
    %s72 = sadd.s32 0, 0
    %s73 = smul.u32 2, %s72
    %s74 = sadd.s32 0, 0
    %s75 = smul.u32 2, %s74
    %s76 = sadd.s32 0, 0
    %s77 = smul.u32 2, %s76
    %p78 = scmp.eq.s32.totalorder 0, 0
    // Predicated region
    $region30: #{tpu_custom_call.1} parent=1 // pred_check
      %p79 = pneg %p78
    $region31: #{tpu_custom_call.1} parent=1 // pred_check_branch
      %81 = sbr.rel (%p79) target = $region33
    $region32: #{tpu_custom_call.1} parent=1 // pred_region
      %82 = vst [vmem:[#allocation9] sm:$0xff] 0.0
      %83 = vst [vmem:[#allocation9 + $0x8] sm:$0xff] 0.0
    $region33: #{tpu_custom_call.1} parent=1 // pred_fallthru
      _
    %s84 = sld [smem:[#allocation2]]
    %s85 = ssub.f32 0.0, %s84
    %v86 = vld [vmem:[#allocation6] sm:$0xff]
    %v87 = vld [vmem:[#allocation6 + $0x8] sm:$0xff]
    %v88 = vstv %s85
    %v89 = vmul.f32 %v88, %v86
    %v90 = vmul.f32 %v88, %v87
    %v91 = vld [vmem:[#allocation3] sm:$0xff]
    %v92 = vld [vmem:[#allocation3 + $0x8] sm:$0xff]
    %v93 = vld [vmem:[#allocation8] sm:$0xff]
    %v94 = vld [vmem:[#allocation8 + $0x8] sm:$0xff]
    %v95 = vsub.f32 %v91, %v93
    %v96 = vsub.f32 %v92, %v94
    %v97 = vmul.f32 %v89, 1.442695
    %v98 = vpow.pop %v97
    %v99 = vmul.f32 %v90, 1.442695
    %v100 = vpow.pop %v99
    %v101 = vmul.f32 %v98, %v95
    %v102 = vmul.f32 %v100, %v96
    %v103 = vmul.f32 %v101, %v95
    %v104 = vmul.f32 %v102, %v96
    %v105 = vsub.f32 %v103, %v89
    %v106 = vsub.f32 %v104, %v90
    %s107 = sadd.s32 0, 0
    %s108 = smul.u32 %s107, 16
    %s109 = sadd.s32 %s108, 16
    %p110 = scmp.gt.s32.totalorder %s109, 16
    %p111 = scmp.le.s32.totalorder %s109, 16
    // Predicated region
    $region34: #{tpu_custom_call.1} parent=1 // pred_check
      %p112 = pneg %p111
    $region35: #{tpu_custom_call.1} parent=1 // pred_check_branch
      %114 = sbr.rel (%p112) target = $region37
    $region36: #{tpu_custom_call.1} parent=1 // pred_region
      %v115 = vld [vmem:[#allocation9] sm:$0xff]
      %v116 = vld [vmem:[#allocation9 + $0x8] sm:$0xff]
      %v117 = vadd.f32 %v105, 0.0
      %v118 = vadd.f32 %v106, 0.0
      %v119 = vadd.f32 %v115, %v117
      %v120 = vadd.f32 %v116, %v118
      %121 = vst [vmem:[#allocation9] sm:$0xff] %v119
      %122 = vst [vmem:[#allocation9 + $0x8] sm:$0xff] %v120
    $region37: #{tpu_custom_call.1} parent=1 // pred_fallthru
      _
    // Predicated region
    $region38: #{tpu_custom_call.1} parent=1 // pred_check
      %p123 = pneg %p110
    $region39: #{tpu_custom_call.1} parent=1 // pred_check_branch
      %125 = sbr.rel (%p123) target = $region41
    $region40: #{tpu_custom_call.1} parent=1 // pred_region
      %v126 = vlaneseq
      %v127 = vshrl.u32 %v126, 7
      %v128 = vadd.s32 %v127, 8
      %v129 = vstv %s108
      %v130 = vadd.s32 %v129, %v127
      %v131 = vadd.s32 %v129, %v128
      %vm132 = vcmp.lt.s32.totalorder %v130, 16
      %vm133 = vcmp.lt.s32.totalorder %v131, 16
      %v134 = vsel %vm132, %v105, 0.0
      %v135 = vsel %vm133, %v106, 0.0
      %v136 = vld [vmem:[#allocation9] sm:$0xff]
      %v137 = vld [vmem:[#allocation9 + $0x8] sm:$0xff]
      %v138 = vadd.f32 %v134, 0.0
      %v139 = vadd.f32 %v135, 0.0
      %v140 = vadd.f32 %v136, %v138
      %v141 = vadd.f32 %v137, %v139
      %142 = vst [vmem:[#allocation9] sm:$0xff] %v140
      %143 = vst [vmem:[#allocation9 + $0x8] sm:$0xff] %v141
    $region41: #{tpu_custom_call.1} parent=1 // pred_fallthru
      _
    // Predicated region
    $region42: #{tpu_custom_call.1} parent=1 // pred_check
      _
    $region43: #{tpu_custom_call.1} parent=1 // pred_check_branch
      %145 = sbr.rel (0) target = $region45
    $region44: #{tpu_custom_call.1} parent=1 // pred_region
      %s147 = ssub.s32 256, 256
      %148 = vsyncadd [#allocation5], %s147
      %s149 = sshll.u32 [#allocation9], 4
      %s150 = int_to_ptr.vmem [resolvable:$true] %s149
      %155 = dma.vmem_to_hbm [thread:$0]  %s150, 256, %s4, [#allocation5], 128, 128, 8
    $region45: #{tpu_custom_call.1} parent=1 // pred_fallthru
      _
    // Predicated region
    $region46: #{tpu_custom_call.1} parent=1 // pred_check
      _
    $region47: #{tpu_custom_call.1} parent=1 // pred_check_branch
      %157 = sbr.rel (0) target = $region49
    $region48: #{tpu_custom_call.1} parent=1 // pred_region
      %158 = dma.done [#allocation5], 256
    $region49: #{tpu_custom_call.1} parent=1 // pred_fallthru
      _
    %159 = vsyncpa [#allocation4], 1
    %160 = vsyncpa [#allocation7], 1
    %161 = vsyncpa [#allocation5], 1

</llo_original>
